<compile_context>
chip_gen: v7x
topology: tpu7x:2x2x1
jax: 0.10.0
libtpu: 0.0.40
codegen_flags: <defaults>
</compile_context>

<pallas_src>
import functools

import jax
import jax.numpy as jnp
from jax.experimental import pallas as pl
from jax.experimental.pallas import tpu as pltpu


# ---------------------------------------------------------------------------
# helpers
# ---------------------------------------------------------------------------
def _pick_time_chunk(seq_len, batch, target_rows=512):
    """Largest divisor of seq_len whose chunk*batch row count stays moderate."""
    best = 1
    for d in range(1, seq_len + 1):
        if seq_len % d == 0 and d * batch <= target_rows:
            best = d
    return best


# ---------------------------------------------------------------------------
# Fused embedding gather + TCNBlock, time-chunked.
#
# Tokens are laid out in (t, b) row order with a 2-timestep halo of dummy ids
# on each side, so chunk i needs extended rows [i*Tc*B, (i*Tc+Tc+4)*B).  The
# chunk's rows are gathered with one small row-DMA each (shared DMA semaphore),
# then conv1 -> relu -> conv2 -> relu -> +x -> relu runs entirely in VMEM.
# conv weights are stacked (3E, E): rows [0:E] read x(t-1), [E:2E] x(t),
# [2E:3E] x(t+1); conv1d zero padding is reproduced by zeroing the halo rows
# at the sequence boundaries and by zeroing h1's out-of-range rows.
# ---------------------------------------------------------------------------
def _emb_tcn_kernel(tok_ref, emb_hbm, w1_ref, b1_ref, w2_ref, b2_ref, o_ref,
                    xbuf, sem, *, chunk_t, batch, emb_dim, fold_taps):
    B, E = batch, emb_dim
    G = (chunk_t + 4) * B           # gathered rows: chunk + 2-timestep halo each side
    H1 = (chunk_t + 2) * B          # conv1 output rows: chunk + 1-timestep halo
    NC = chunk_t * B                # interior rows written out
    chunk = pl.program_id(0)
    last = pl.num_programs(0) - 1
    base = chunk * NC               # offset into the (T+4)*B extended token array

    # ---- batched embedding row gather: G small DMAs on one shared semaphore
    @pl.loop(0, G)
    def _issue(g):
        pltpu.make_async_copy(emb_hbm.at[tok_ref[base + g]], xbuf.at[g],
                              sem.at[0]).start()

    @pl.loop(0, G)
    def _drain(g):
        pltpu.make_async_copy(emb_hbm.at[tok_ref[base + g]], xbuf.at[g],
                              sem.at[0]).wait()

    # ---- conv1d zero padding: halo rows outside [0, T) must be exactly zero
    @pl.when(chunk == 0)
    def _zero_head():
        xbuf[0:2 * B, :] = jnp.zeros((2 * B, E), jnp.float32)

    @pl.when(chunk == last)
    def _zero_tail():
        xbuf[G - 2 * B:G, :] = jnp.zeros((2 * B, E), jnp.float32)

    def conv(xl, xm, xr, w_ref, b_ref):
        if fold_taps:
            # small E: fill the MXU contraction dim with one (., 3E) @ (3E, E)
            y = jnp.dot(jnp.concatenate([xl, xm, xr], axis=-1), w_ref[...],
                        preferred_element_type=jnp.float32)
        else:
            # large E: 3 accumulating matmuls, no lane concat / no 3E slab
            y = (jnp.dot(xl, w_ref[0:E, :], preferred_element_type=jnp.float32)
                 + jnp.dot(xm, w_ref[E:2 * E, :], preferred_element_type=jnp.float32)
                 + jnp.dot(xr, w_ref[2 * E:3 * E, :], preferred_element_type=jnp.float32))
        return y + b_ref[...]

    # conv1 + relu (+ dropout=identity) over the chunk plus a 1-timestep halo
    h1 = jnp.maximum(conv(xbuf[0:H1], xbuf[B:B + H1], xbuf[2 * B:2 * B + H1],
                          w1_ref, b1_ref), 0.0)

    # conv2's zero padding: h1 at global t = -1 / t = T is a pad value (zero),
    # not conv1 applied outside the sequence.
    r1 = jax.lax.broadcasted_iota(jnp.int32, (H1, 1), 0)
    head = jnp.where(chunk == 0, B, 0)
    tail = jnp.where(chunk == last, B, 0)
    h1 = jnp.where((r1 >= head) & (r1 < H1 - tail), h1, 0.0)

    # conv2 + relu over the interior, then residual + relu
    h2 = jnp.maximum(conv(h1[0:NC], h1[B:B + NC], h1[2 * B:2 * B + NC],
                          w2_ref, b2_ref), 0.0)
    o_ref[...] = jnp.maximum(h2 + xbuf[2 * B:2 * B + NC], 0.0)


def emb_tcn(tok_ext, emb_table, w1, b1, w2, b2, *, seq_len, batch, chunk_t):
    e = emb_table.shape[1]
    n_chunks = seq_len // chunk_t
    rows = chunk_t * batch
    g_rows = (chunk_t + 4) * batch
    kern = functools.partial(_emb_tcn_kernel, chunk_t=chunk_t, batch=batch,
                             emb_dim=e, fold_taps=(e < 128))
    return pl.pallas_call(
        kern,
        out_shape=jax.ShapeDtypeStruct((seq_len * batch, e), jnp.float32),
        grid_spec=pltpu.PrefetchScalarGridSpec(
            num_scalar_prefetch=1,
            grid=(n_chunks,),
            in_specs=[
                pl.BlockSpec(memory_space=pl.ANY),                 # emb table (HBM)
                pl.BlockSpec((3 * e, e), lambda i, tok: (0, 0)),   # conv1 weight
                pl.BlockSpec((1, e), lambda i, tok: (0, 0)),       # conv1 bias
                pl.BlockSpec((3 * e, e), lambda i, tok: (0, 0)),   # conv2 weight
                pl.BlockSpec((1, e), lambda i, tok: (0, 0)),       # conv2 bias
            ],
            out_specs=pl.BlockSpec((rows, e), lambda i, tok: (i, 0)),
            scratch_shapes=[pltpu.VMEM((g_rows, e), jnp.float32),
                            pltpu.SemaphoreType.DMA((1,))],
        ),
        compiler_params=pltpu.CompilerParams(
            dimension_semantics=("parallel",)),    # chunks are independent
    )(tok_ext, emb_table, w1, b1, w2, b2)


# ---------------------------------------------------------------------------
# Multi-layer LSTM, all layers fused in one pallas_call, time-chunked grid.
#
# Fused gate weights: w_ih (D_in, 4H), w_hh (H, 4H), bias (1, 4H) with gate
# order (i, f, g, o) and bias = b_ih + b_hh.  Per chunk and per layer, the
# input projection X @ W_ih + b is one big MXU matmul into a (Tc*B, 4H) VMEM
# scratch; the serial time loop only does one (B, H) @ (H, 4H) matmul per step
# with (h, c) carried as fori_loop values (vregs).  Inter-layer activations
# ping through a single (Tc*B, H) scratch; only the final (B, H) hidden state
# of the last layer is emitted.
# ---------------------------------------------------------------------------
def _lstm_kernel(x_ref, *args, chunk_t, batch, hidden, num_layers, unroll):
    B, H, L = batch, hidden, num_layers
    w_refs = args[:3 * L]
    o_ref = args[3 * L]
    h_st, c_st, act_ref, xp_ref = args[3 * L + 1:]

    @pl.when(pl.program_id(0) == 0)
    def _init():
        h_st[...] = jnp.zeros_like(h_st)
        c_st[...] = jnp.zeros_like(c_st)

    h_last = None
    for l in range(L):
        w_ih, w_hh, bias = w_refs[3 * l], w_refs[3 * l + 1], w_refs[3 * l + 2]
        src = x_ref if l == 0 else act_ref

        # Hoisted input projection for the whole chunk (one big MXU matmul).
        xp_ref[...] = (jnp.dot(src[...], w_ih[...],
                               preferred_element_type=jnp.float32) + bias[...])
        whh = w_hh[...]
        write_seq = (l + 1 < L)   # only intermediate layers feed a next layer

        def step(t, carry, *, _write=write_seq):
            h, c = carry
            off = pl.multiple_of(t * B, B)
            gates = xp_ref[pl.ds(off, B), :] + jnp.dot(
                h, whh, preferred_element_type=jnp.float32)
            i = jax.nn.sigmoid(gates[:, 0:H])
            f = jax.nn.sigmoid(gates[:, H:2 * H])
            g = jnp.tanh(gates[:, 2 * H:3 * H])
            o = jax.nn.sigmoid(gates[:, 3 * H:4 * H])
            c_new = f * c + i * g
            h_new = o * jnp.tanh(c_new)
            if _write:
                act_ref[pl.ds(off, B), :] = h_new
            return (h_new, c_new)

        h_fin, c_fin = jax.lax.fori_loop(0, chunk_t, step,
                                         (h_st[l], c_st[l]),
                                         unroll=min(unroll, chunk_t))
        h_st[l] = h_fin
        c_st[l] = c_fin
        h_last = h_fin

    # Only the final timestep of the last layer is needed downstream.
    o_ref[...] = h_last


def lstm_stack(x, lstm_params, *, seq_len, batch, chunk_t, unroll=4):
    e = x.shape[1]
    h = lstm_params[0][1].shape[0]
    num_layers = len(lstm_params)
    rows = chunk_t * batch
    n_chunks = seq_len // chunk_t

    in_specs = [pl.BlockSpec((rows, e), lambda i: (i, 0))]
    operands = [x]
    for (w_ih, w_hh, bias) in lstm_params:
        d_in = w_ih.shape[0]
        in_specs += [pl.BlockSpec((d_in, 4 * h), lambda i: (0, 0)),
                     pl.BlockSpec((h, 4 * h), lambda i: (0, 0)),
                     pl.BlockSpec((1, 4 * h), lambda i: (0, 0))]
        operands += [w_ih, w_hh, bias]

    kern = functools.partial(_lstm_kernel, chunk_t=chunk_t, batch=batch,
                             hidden=h, num_layers=num_layers, unroll=unroll)
    return pl.pallas_call(
        kern,
        out_shape=jax.ShapeDtypeStruct((batch, h), jnp.float32),
        grid=(n_chunks,),
        in_specs=in_specs,
        out_specs=pl.BlockSpec((batch, h), lambda i: (0, 0)),
        scratch_shapes=[pltpu.VMEM((num_layers, batch, h), jnp.float32),  # h per layer
                        pltpu.VMEM((num_layers, batch, h), jnp.float32),  # c per layer
                        pltpu.VMEM((rows, h), jnp.float32),               # inter-layer acts
                        pltpu.VMEM((rows, 4 * h), jnp.float32)],          # X @ W_ih + b
        compiler_params=pltpu.CompilerParams(
            dimension_semantics=("arbitrary",)),   # serial recurrence over chunks
    )(*operands)


# ---------------------------------------------------------------------------
# Final Linear: (B, H) @ (H, V) + b, tiled over the vocab dim ('parallel').
# ---------------------------------------------------------------------------
def _fc_kernel(h_ref, w_ref, b_ref, o_ref):
    o_ref[...] = jnp.dot(h_ref[...], w_ref[...],
                         preferred_element_type=jnp.float32) + b_ref[...]


def fc(hstate, w, b, *, tile_v=2048):
    bsz, hdim = hstate.shape
    v = w.shape[1]
    if tile_v >= v:
        tv = v
    else:
        tv = max(128, (tile_v // 128) * 128)
    return pl.pallas_call(
        _fc_kernel,
        out_shape=jax.ShapeDtypeStruct((bsz, v), jnp.float32),
        grid=(pl.cdiv(v, tv),),
        in_specs=[
            pl.BlockSpec((bsz, hdim), lambda j: (0, 0)),
            pl.BlockSpec((hdim, tv), lambda j: (0, j)),
            pl.BlockSpec((1, tv), lambda j: (0, j)),
        ],
        out_specs=pl.BlockSpec((bsz, tv), lambda j: (0, j)),
        compiler_params=pltpu.CompilerParams(dimension_semantics=("parallel",)),
    )(hstate, w, b)


# ---------------------------------------------------------------------------
# Full forward (wrapper glue: token clip/pad/transpose, chunk picking, slicing)
# ---------------------------------------------------------------------------
def lstm_tcn_forward(tokens, params):
    b0, t = tokens.shape
    vocab, e = params["embedding"].shape

    # Pad batch to a multiple of 8 (sublane width); padded rows carry token 0
    # and are sliced away at the end.
    b = max(8, ((b0 + 7) // 8) * 8)
    tok = jnp.clip(tokens.astype(jnp.int32), 0, vocab - 1)  # PyTorch raises on OOB ids
    if b != b0:
        tok = jnp.pad(tok, ((0, b - b0), (0, 0)))

    # (T, B) row order with a 2-timestep halo of in-range dummy ids each side
    # (halo rows are zeroed inside the kernel -> exact conv1d zero padding).
    tok_ext = jnp.pad(jnp.transpose(tok, (1, 0)), ((2, 2), (0, 0)))
    tok_ext = tok_ext.reshape((t + 4) * b)

    chunk_t = _pick_time_chunk(t, b)

    x = emb_tcn(tok_ext, params["embedding"],
                params["tcn_w1"], params["tcn_b1"],
                params["tcn_w2"], params["tcn_b2"],
                seq_len=t, batch=b, chunk_t=chunk_t)          # (T*B, E)

    final_h = lstm_stack(x, params["lstm"], seq_len=t, batch=b,
                         chunk_t=chunk_t)                     # (B, H) == lstm_out[:, -1, :]

    logits = fc(final_h, params["fc_w"], params["fc_b"])      # (B, vocab)
    return logits[:b0]


def init_params(key, vocab_size, embedding_dim, hidden_size, num_layers):
    keys = jax.random.split(key, 8)

    def nrm(k, shape, scale=0.1):
        return (scale * jax.random.normal(k, shape)).astype(jnp.float32)

    emb = nrm(keys[0], (vocab_size, embedding_dim))
    emb = emb.at[0].set(0.0)                                  # padding_idx=0

    params = {
        "embedding": emb,
        # stacked-tap conv weights: (3E, E) = [tap(t-1); tap(t); tap(t+1)]
        "tcn_w1": nrm(keys[1], (3 * embedding_dim, embedding_dim)),
        "tcn_b1": nrm(keys[2], (1, embedding_dim)),
        "tcn_w2": nrm(keys[3], (3 * embedding_dim, embedding_dim)),
        "tcn_b2": nrm(keys[4], (1, embedding_dim)),
        "fc_w": nrm(keys[5], (hidden_size, vocab_size)),
        "fc_b": nrm(keys[6], (1, vocab_size)),
    }
    lstm = []
    kk = jax.random.split(keys[7], num_layers * 3)
    for l in range(num_layers):
        din = embedding_dim if l == 0 else hidden_size
        # fused gate layout (i, f, g, o) along the last axis; bias = b_ih + b_hh
        w_ih = nrm(kk[3 * l + 0], (din, 4 * hidden_size))
        w_hh = nrm(kk[3 * l + 1], (hidden_size, 4 * hidden_size))
        bias = nrm(kk[3 * l + 2], (1, 4 * hidden_size))
        lstm.append((w_ih, w_hh, bias))
    params["lstm"] = lstm
    return params


if __name__ == "__main__":
    vocab_size, embedding_dim, hidden_size, num_layers = 16, 32, 32, 2
    batch, seq_len = 2, 8

    key = jax.random.PRNGKey(0)
    k_tok, k_par = jax.random.split(key)
    tokens = jax.random.randint(k_tok, (batch, seq_len), 0, vocab_size,
                                dtype=jnp.int32)
    params = init_params(k_par, vocab_size, embedding_dim, hidden_size,
                         num_layers)

    logits = lstm_tcn_forward(tokens, params)
    jax.block_until_ready(logits)
    assert logits.shape == (batch, vocab_size)
    assert logits.dtype == jnp.float32
    print("KERNEL_OK")
</pallas_src>

<mosaic_0001>
module attributes {stable_mosaic.version = 11 : i64} {
  func.func @_emb_tcn_kernel(%arg0: i32, %arg1: memref<96xi32, #tpu.memory_space<smem>>, %arg2: memref<16x32xf32, #tpu.memory_space<any>>, %arg3: memref<96x32xf32, #tpu.memory_space<vmem>>, %arg4: memref<1x32xf32, #tpu.memory_space<vmem>>, %arg5: memref<96x32xf32, #tpu.memory_space<vmem>>, %arg6: memref<1x32xf32, #tpu.memory_space<vmem>>, %arg7: memref<64x32xf32, #tpu.memory_space<vmem>>, %arg8: memref<96x32xf32, #tpu.memory_space<vmem>>, %arg9: memref<1x!tpu.dma_semaphore, #tpu.memory_space<semaphore_mem>>) attributes {dimension_semantics = [#tpu.dimension_semantics<parallel>], iteration_bounds = array<i64: 1>, scalar_prefetch = 1 : i64, scratch_operands = 2 : i64, tpu.core_type = #tpu.core_type<tc>, window_params = [{}, {pipeline_mode = #tpu.pipeline_mode<synchronous>, transform_indices = @transform_1, window_bounds = array<i64: 96, 32>}, {pipeline_mode = #tpu.pipeline_mode<synchronous>, transform_indices = @transform_2, window_bounds = array<i64: 1, 32>}, {pipeline_mode = #tpu.pipeline_mode<synchronous>, transform_indices = @transform_3, window_bounds = array<i64: 96, 32>}, {pipeline_mode = #tpu.pipeline_mode<synchronous>, transform_indices = @transform_4, window_bounds = array<i64: 1, 32>}, {transform_indices = @transform_5, window_bounds = array<i64: 64, 32>}]} {
    %c64_i32 = arith.constant 64 : i32
    %0 = arith.muli %arg0, %c64_i32 : i32
    %c0_i32 = arith.constant 0 : i32
    %c96_i32 = arith.constant 96 : i32
    %1 = arith.addi %c0_i32, %c96_i32 : i32
    %c1_i32 = arith.constant 1 : i32
    scf.for %arg10 = %c0_i32 to %1 step %c1_i32  : i32 {
      %c1_i32_34 = arith.constant 1 : i32
      %51 = arith.muli %arg10, %c1_i32_34 : i32
      %c0_i32_35 = arith.constant 0 : i32
      %52 = arith.addi %c0_i32_35, %51 : i32
      %53 = arith.addi %0, %52 : i32
      %54 = arith.index_cast %53 : i32 to index
      %55 = memref.load %arg1[%54] : memref<96xi32, #tpu.memory_space<smem>>
      %c0_i32_36 = arith.constant 0 : i32
      %c0_i32_37 = arith.constant 0 : i32
      %56 = tpu.memref_slice %arg2[%55, %c0_i32_37] : memref<16x32xf32, #tpu.memory_space<any>> -> memref<1x32xf32, #tpu.memory_space<any>>
      %57 = tpu.memref_squeeze %56 : memref<1x32xf32, #tpu.memory_space<any>> -> memref<32xf32, #tpu.memory_space<any>>
      %c0_i32_38 = arith.constant 0 : i32
      %58 = tpu.memref_slice %arg8[%52, %c0_i32_38] : memref<96x32xf32, #tpu.memory_space<vmem>> -> memref<1x32xf32, #tpu.memory_space<vmem>>
      %59 = tpu.memref_squeeze %58 : memref<1x32xf32, #tpu.memory_space<vmem>> -> memref<32xf32, #tpu.memory_space<vmem>>
      %60 = tpu.memref_slice %arg9[%c0_i32_36] : memref<1x!tpu.dma_semaphore, #tpu.memory_space<semaphore_mem>> -> memref<1x!tpu.dma_semaphore, #tpu.memory_space<semaphore_mem>>
      %61 = tpu.memref_squeeze %60 : memref<1x!tpu.dma_semaphore, #tpu.memory_space<semaphore_mem>> -> memref<!tpu.dma_semaphore, #tpu.memory_space<semaphore_mem>>
      tpu.enqueue_dma source(%57 : memref<32xf32, #tpu.memory_space<any>>) target(%59 : memref<32xf32, #tpu.memory_space<vmem>>) target_semaphore(%61 : memref<!tpu.dma_semaphore, #tpu.memory_space<semaphore_mem>>)
    }
    %c96_i32_0 = arith.constant 96 : i32
    %c0_i32_1 = arith.constant 0 : i32
    %c96_i32_2 = arith.constant 96 : i32
    %2 = arith.addi %c0_i32_1, %c96_i32_2 : i32
    %c1_i32_3 = arith.constant 1 : i32
    scf.for %arg10 = %c0_i32_1 to %2 step %c1_i32_3  : i32 {
      %c1_i32_34 = arith.constant 1 : i32
      %51 = arith.muli %arg10, %c1_i32_34 : i32
      %c0_i32_35 = arith.constant 0 : i32
      %52 = arith.addi %c0_i32_35, %51 : i32
      %53 = arith.addi %0, %52 : i32
      %54 = arith.index_cast %53 : i32 to index
      %55 = memref.load %arg1[%54] : memref<96xi32, #tpu.memory_space<smem>>
      %c0_i32_36 = arith.constant 0 : i32
      %c0_i32_37 = arith.constant 0 : i32
      %56 = tpu.memref_slice %arg2[%55, %c0_i32_37] : memref<16x32xf32, #tpu.memory_space<any>> -> memref<1x32xf32, #tpu.memory_space<any>>
      %57 = tpu.memref_squeeze %56 : memref<1x32xf32, #tpu.memory_space<any>> -> memref<32xf32, #tpu.memory_space<any>>
      %c0_i32_38 = arith.constant 0 : i32
      %58 = tpu.memref_slice %arg8[%52, %c0_i32_38] : memref<96x32xf32, #tpu.memory_space<vmem>> -> memref<1x32xf32, #tpu.memory_space<vmem>>
      %59 = tpu.memref_squeeze %58 : memref<1x32xf32, #tpu.memory_space<vmem>> -> memref<32xf32, #tpu.memory_space<vmem>>
      %60 = tpu.memref_slice %arg9[%c0_i32_36] : memref<1x!tpu.dma_semaphore, #tpu.memory_space<semaphore_mem>> -> memref<1x!tpu.dma_semaphore, #tpu.memory_space<semaphore_mem>>
      %61 = tpu.memref_squeeze %60 : memref<1x!tpu.dma_semaphore, #tpu.memory_space<semaphore_mem>> -> memref<!tpu.dma_semaphore, #tpu.memory_space<semaphore_mem>>
      tpu.wait_dma2 semaphore(%61 : memref<!tpu.dma_semaphore, #tpu.memory_space<semaphore_mem>>) src(%57 : memref<32xf32, #tpu.memory_space<any>>) dst(%59 : memref<32xf32, #tpu.memory_space<vmem>>)
    }
    %c96_i32_4 = arith.constant 96 : i32
    %c0_i32_5 = arith.constant 0 : i32
    %3 = arith.cmpi eq, %arg0, %c0_i32_5 : i32
    %4 = arith.extui %3 : i1 to i32
    %c0_i32_6 = arith.constant 0 : i32
    %5 = arith.cmpi ne, %4, %c0_i32_6 : i32
    scf.if %5 {
      %cst_34 = arith.constant 0.000000e+00 : f32
      %51 = vector.broadcast %cst_34 : f32 to vector<16x32xf32>
      %c0_35 = arith.constant 0 : index
      %c0_36 = arith.constant 0 : index
      %52 = vector.load %arg8[%c0_35, %c0_36] : memref<96x32xf32, #tpu.memory_space<vmem>>, vector<16x32xf32>
      tpu.vector_store %arg8[%c0_35, %c0_36], %51 {strides = array<i32>} : memref<96x32xf32, #tpu.memory_space<vmem>>, vector<16x32xf32>,
    } else {
    }
    %c0_i32_7 = arith.constant 0 : i32
    %6 = arith.cmpi eq, %arg0, %c0_i32_7 : i32
    %7 = arith.extui %6 : i1 to i32
    %c0_i32_8 = arith.constant 0 : i32
    %8 = arith.cmpi ne, %7, %c0_i32_8 : i32
    scf.if %8 {
      %cst_34 = arith.constant 0.000000e+00 : f32
      %51 = vector.broadcast %cst_34 : f32 to vector<16x32xf32>
      %c80 = arith.constant 80 : index
      %c0_35 = arith.constant 0 : index
      %52 = vector.load %arg8[%c80, %c0_35] : memref<96x32xf32, #tpu.memory_space<vmem>>, vector<16x32xf32>
      tpu.vector_store %arg8[%c80, %c0_35], %51 {strides = array<i32>} : memref<96x32xf32, #tpu.memory_space<vmem>>, vector<16x32xf32>,
    } else {
    }
    %c0 = arith.constant 0 : index
    %c0_9 = arith.constant 0 : index
    %9 = vector.load %arg8[%c0, %c0_9] : memref<96x32xf32, #tpu.memory_space<vmem>>, vector<80x32xf32>
    %c8 = arith.constant 8 : index
    %c0_10 = arith.constant 0 : index
    %10 = vector.load %arg8[%c8, %c0_10] : memref<96x32xf32, #tpu.memory_space<vmem>>, vector<80x32xf32>
    %c16 = arith.constant 16 : index
    %c0_11 = arith.constant 0 : index
    %11 = vector.load %arg8[%c16, %c0_11] : memref<96x32xf32, #tpu.memory_space<vmem>>, vector<80x32xf32>
    %12 = tpu.concatenate %9, %10, %11 in 1 : vector<80x32xf32>, vector<80x32xf32>, vector<80x32xf32> -> vector<80x96xf32>
    %c0_12 = arith.constant 0 : index
    %c0_13 = arith.constant 0 : index
    %13 = vector.load %arg3[%c0_12, %c0_13] : memref<96x32xf32, #tpu.memory_space<vmem>>, vector<96x32xf32>
    %cst = arith.constant dense<0.000000e+00> : vector<80x32xf32>
    %14 = tpu.matmul %12, %13, %cst {dimension_numbers = #tpu.dot_dimension_numbers<[1], [0], [0], [1], [0, 0, 1, 1], [], []>} : vector<80x96xf32>, vector<96x32xf32>, vector<80x32xf32> -> vector<80x32xf32>
    %c0_14 = arith.constant 0 : index
    %c0_15 = arith.constant 0 : index
    %15 = vector.load %arg4[%c0_14, %c0_15] : memref<1x32xf32, #tpu.memory_space<vmem>>, vector<1x32xf32>
    %16 = vector.broadcast %15 : vector<1x32xf32> to vector<80x32xf32>
    %17 = arith.addf %14, %16 : vector<80x32xf32>
    %cst_16 = arith.constant 0.000000e+00 : f32
    %18 = vector.broadcast %cst_16 : f32 to vector<80x32xf32>
    %19 = arith.maximumf %17, %18 : vector<80x32xf32>
    %20 = tpu.iota {dimensions = array<i32: 0>} : vector<80x1xi32>
    %c0_i32_17 = arith.constant 0 : i32
    %21 = arith.cmpi eq, %arg0, %c0_i32_17 : i32
    %c8_i32 = arith.constant 8 : i32
    %c0_i32_18 = arith.constant 0 : i32
    %22 = arith.select %21, %c8_i32, %c0_i32_18 : i32
    %c0_i32_19 = arith.constant 0 : i32
    %23 = arith.cmpi eq, %arg0, %c0_i32_19 : i32
    %c8_i32_20 = arith.constant 8 : i32
    %c0_i32_21 = arith.constant 0 : i32
    %24 = arith.select %23, %c8_i32_20, %c0_i32_21 : i32
    %25 = vector.broadcast %22 : i32 to vector<80x1xi32>
    %26 = arith.cmpi sge, %20, %25 : vector<80x1xi32>
    %c80_i32 = arith.constant 80 : i32
    %27 = arith.subi %c80_i32, %24 : i32
    %28 = vector.broadcast %27 : i32 to vector<80x1xi32>
    %29 = arith.cmpi slt, %20, %28 : vector<80x1xi32>
    %30 = arith.andi %26, %29 : vector<80x1xi1>
    %cst_22 = arith.constant 0.000000e+00 : f32
    %31 = vector.shape_cast %30 : vector<80x1xi1> to vector<80x1xi1>
    %32 = vector.broadcast %31 : vector<80x1xi1> to vector<80x32xi1>
    %33 = vector.broadcast %cst_22 : f32 to vector<80x32xf32>
    %34 = arith.select %32, %19, %33 : vector<80x32xi1>, vector<80x32xf32>
    %35 = vector.extract_strided_slice %34 {offsets = [0, 0], sizes = [64, 32], strides = [1, 1]} : vector<80x32xf32> to vector<64x32xf32>
    %36 = vector.extract_strided_slice %34 {offsets = [8, 0], sizes = [64, 32], strides = [1, 1]} : vector<80x32xf32> to vector<64x32xf32>
    %37 = vector.extract_strided_slice %34 {offsets = [16, 0], sizes = [64, 32], strides = [1, 1]} : vector<80x32xf32> to vector<64x32xf32>
    %38 = tpu.concatenate %35, %36, %37 in 1 : vector<64x32xf32>, vector<64x32xf32>, vector<64x32xf32> -> vector<64x96xf32>
    %c0_23 = arith.constant 0 : index
    %c0_24 = arith.constant 0 : index
    %39 = vector.load %arg5[%c0_23, %c0_24] : memref<96x32xf32, #tpu.memory_space<vmem>>, vector<96x32xf32>
    %cst_25 = arith.constant dense<0.000000e+00> : vector<64x32xf32>
    %40 = tpu.matmul %38, %39, %cst_25 {dimension_numbers = #tpu.dot_dimension_numbers<[1], [0], [0], [1], [0, 0, 1, 1], [], []>} : vector<64x96xf32>, vector<96x32xf32>, vector<64x32xf32> -> vector<64x32xf32>
    %c0_26 = arith.constant 0 : index
    %c0_27 = arith.constant 0 : index
    %41 = vector.load %arg6[%c0_26, %c0_27] : memref<1x32xf32, #tpu.memory_space<vmem>>, vector<1x32xf32>
    %42 = vector.broadcast %41 : vector<1x32xf32> to vector<64x32xf32>
    %43 = arith.addf %40, %42 : vector<64x32xf32>
    %cst_28 = arith.constant 0.000000e+00 : f32
    %44 = vector.broadcast %cst_28 : f32 to vector<64x32xf32>
    %45 = arith.maximumf %43, %44 : vector<64x32xf32>
    %c16_29 = arith.constant 16 : index
    %c0_30 = arith.constant 0 : index
    %46 = vector.load %arg8[%c16_29, %c0_30] : memref<96x32xf32, #tpu.memory_space<vmem>>, vector<64x32xf32>
    %47 = arith.addf %45, %46 : vector<64x32xf32>
    %cst_31 = arith.constant 0.000000e+00 : f32
    %48 = vector.broadcast %cst_31 : f32 to vector<64x32xf32>
    %49 = arith.maximumf %47, %48 : vector<64x32xf32>
    %c0_32 = arith.constant 0 : index
    %c0_33 = arith.constant 0 : index
    %50 = vector.load %arg7[%c0_32, %c0_33] : memref<64x32xf32, #tpu.memory_space<vmem>>, vector<64x32xf32>
    tpu.vector_store %arg7[%c0_32, %c0_33], %49 {strides = array<i32>} : memref<64x32xf32, #tpu.memory_space<vmem>>, vector<64x32xf32>,
    return
  }
  func.func @transform_1(%arg0: i32, %arg1: memref<96xi32, #tpu.memory_space<smem>>) -> (i32, i32) {
    %c0_i32 = arith.constant 0 : i32
    %c0_i32_0 = arith.constant 0 : i32
    %c0_i32_1 = arith.constant 0 : i32
    return %c0_i32, %c0_i32_0 : i32, i32
  }
  func.func @transform_2(%arg0: i32, %arg1: memref<96xi32, #tpu.memory_space<smem>>) -> (i32, i32) {
    %c0_i32 = arith.constant 0 : i32
    %c0_i32_0 = arith.constant 0 : i32
    %c0_i32_1 = arith.constant 0 : i32
    return %c0_i32, %c0_i32_0 : i32, i32
  }
  func.func @transform_3(%arg0: i32, %arg1: memref<96xi32, #tpu.memory_space<smem>>) -> (i32, i32) {
    %c0_i32 = arith.constant 0 : i32
    %c0_i32_0 = arith.constant 0 : i32
    %c0_i32_1 = arith.constant 0 : i32
    return %c0_i32, %c0_i32_0 : i32, i32
  }
  func.func @transform_4(%arg0: i32, %arg1: memref<96xi32, #tpu.memory_space<smem>>) -> (i32, i32) {
    %c0_i32 = arith.constant 0 : i32
    %c0_i32_0 = arith.constant 0 : i32
    %c0_i32_1 = arith.constant 0 : i32
    return %c0_i32, %c0_i32_0 : i32, i32
  }
  func.func @transform_5(%arg0: i32, %arg1: memref<96xi32, #tpu.memory_space<smem>>) -> (i32, i32) {
    %c0_i32 = arith.constant 0 : i32
    %c0_i32_0 = arith.constant 0 : i32
    return %arg0, %c0_i32 : i32, i32
  }
}

</mosaic_0001>

<llo_original>
// kernel: tpu_custom_call.1
$region0: #{tpu_custom_call.1}
  #allocation0 [shape = 'u32[]', space=smem, size = 0x4, offset = 0x4, fixed_abs, tag = 'smem constant byte address 0x4 - core index']
  #allocation1 [shape = 'u32[144,128]{1,0:T(1,128)}', space=vmem, size = 0x12000, scoped, tag = 'internal scratch']
  #allocation2 [shape = 'f32[96,32]{1,0:T(8,128)}', space=vmem, size = 0xc000, scoped, tag = 'scratch operand']
  #allocation3 [shape = 's32[1]{0}', space=sflag, size = 0x4, scoped, tag = 'scratch operand']
  #allocation4 [shape = 's32[1]{0}', space=sflag, size = 0x4, scoped, tag = 'scoped memory for tpu_custom_call.1']
  #allocation5 [shape = 'u8[512]{0}', space=smem, size = 0x200, scoped, tag = 'prefetched SMEM operand 0']
  #allocation6 [shape = 's32[]', space=sflag, size = 0x4, offset = 0, fixed_abs, tag = 'sflag constant byte address 0x0 - dummy sync flag']
  %s0 = inlined_call_operand.vmem [shape: s32[96], index: 0, kind: input, shape index: {}]
  %s1 = inlined_call_operand.vmem [shape: f32[16,32], index: 1, kind: input, shape index: {}]
  %s2 = inlined_call_operand.vmem [shape: f32[96,32], index: 2, kind: input, shape index: {}]
  %s3 = inlined_call_operand.vmem [shape: f32[1,32], index: 3, kind: input, shape index: {}]
  %s4 = inlined_call_operand.vmem [shape: f32[96,32], index: 4, kind: input, shape index: {}]
  %s5 = inlined_call_operand.vmem [shape: f32[1,32], index: 5, kind: input, shape index: {}]
  %s6 = inlined_call_operand.vmem [shape: f32[64,32], index: 6, kind: output, shape index: {}]
  %s7 = sld [smem:[#allocation0]]
  $region74: #{tpu_custom_call.1} parent=0
    _
  %s9 = ssub.s32 1, %s7
  %s10 = scalar_select 0, %s9, %s7
  %s11 = sshll.u32 %s0, 4
  %s12 = int_to_ptr.vmem [resolvable:$true] %s11
  %14 = dma.vmem_to_smem %s12, 16, [#allocation5], [#allocation4]
  %15 = dma.done [#allocation4], 16
  %16 = sfence
  // Predicated region
  $region2: #{tpu_custom_call.1} parent=0 // pred_check
    _
  $region3: #{tpu_custom_call.1} parent=0 // pred_check_branch
    %18 = sbr.rel (0) target = $region5
  $region4: #{tpu_custom_call.1} parent=0 // pred_region
    _
  $region5: #{tpu_custom_call.1} parent=0 // pred_fallthru
    _
  // Predicated region
  $region6: #{tpu_custom_call.1} parent=0 // pred_check
    _
  $region7: #{tpu_custom_call.1} parent=0 // pred_check_branch
    %20 = sbr.rel (0) target = $region9
  $region8: #{tpu_custom_call.1} parent=0 // pred_region
    _
  $region9: #{tpu_custom_call.1} parent=0 // pred_fallthru
    _
  // Predicated region
  $region10: #{tpu_custom_call.1} parent=0 // pred_check
    _
  $region11: #{tpu_custom_call.1} parent=0 // pred_check_branch
    %22 = sbr.rel (0) target = $region13
  $region12: #{tpu_custom_call.1} parent=0 // pred_region
    _
  $region13: #{tpu_custom_call.1} parent=0 // pred_fallthru
    _
  // Predicated region
  $region14: #{tpu_custom_call.1} parent=0 // pred_check
    _
  $region15: #{tpu_custom_call.1} parent=0 // pred_check_branch
    %24 = sbr.rel (0) target = $region17
  $region16: #{tpu_custom_call.1} parent=0 // pred_region
    _
  $region17: #{tpu_custom_call.1} parent=0 // pred_fallthru
    _
  %s25 = smul.u32 0, 64
  loop: start=0, step=1, limit=96
  $region18: #{tpu_custom_call.1} parent=0 // loop_pre_header
    _
  $region19: #{tpu_custom_call.1} parent=0 // loop_header
    %s27 = sphi 0, %s31
    %p28 = scmp.ge.s32.totalorder %s27, 96
  $region20: #{tpu_custom_call.1} parent=0 // loop_header_branch
    %30 = sbr.rel (%p28) target = $region24
  $region21: #{tpu_custom_call.1} parent=0 // loop_body
    %s32 = sadd.s32 %s25, %s27
    %s33 = sld [smem:[#allocation5 + %s32]]
    %s34 = scalar_lea.vmem %s1, %s33
    %s35 = scalar_lea.vmem [#allocation2], %s27
    %p37 = scmp.lt.u32.totalorder 1, 8
    %p38 = pneg %p37
    // Predicated region
    $region25: #{tpu_custom_call.1} parent=21 // pred_check
      _
    $region26: #{tpu_custom_call.1} parent=21 // pred_check_branch
      %40 = sbr.rel (%p37) target = $region28
    $region27: #{tpu_custom_call.1} parent=21 // pred_region
      %s55 = sand.u32 1, 7
      %p56 = scmp.eq.s32.totalorder %s55, 0
      %p57 = pneg %p56
      // Predicated region
      $region40: #{tpu_custom_call.1} parent=27 // pred_check
        _
      $region41: #{tpu_custom_call.1} parent=27 // pred_check_branch
        %59 = sbr.rel (%p56) target = $region43
      $region42: #{tpu_custom_call.1} parent=27 // pred_region
        %s60 = sand.u32 1, 7
        %s61 = ssub.s32 1, %s60
        %s62 = scalar_lea.vmem %s34, %s61
        %s63 = ssub.s32 1, %s60
        %s64 = scalar_lea.vmem %s35, %s63 [#allocation2]
        %s65 = sshllo.u32 0, %s60
        loop: start=0, step=1, limit=1
        $region44: #{tpu_custom_call.1} parent=42 // loop_pre_header
          _
        $region45: #{tpu_custom_call.1} parent=42 // loop_header
          %s67 = sphi 0, %s71
          %p68 = scmp.ge.s32.totalorder %s67, 1
          %s72 = sphi %s62, %s62
          %s73 = sphi %s64, %s64
        $region46: #{tpu_custom_call.1} parent=42 // loop_header_branch
          %70 = sbr.rel (%p68) target = $region50
        $region47: #{tpu_custom_call.1} parent=42 // loop_body
          %v74 = vld [vmem:[%s72] sm:%s65]
          %75 = vst [vmem:[%s73] sm:%s65] %v74
        $region48: #{tpu_custom_call.1} parent=42 // loop_footer
          %s71 = sadd.s32 1, %s67
        $region49: #{tpu_custom_call.1} parent=42 // loop_footer_branch
          %66 = sbr.rel target = $region45
        $region50: #{tpu_custom_call.1} parent=42 // loop_exit
          _
      $region43: #{tpu_custom_call.1} parent=27 // pred_fallthru
        _
    $region28: #{tpu_custom_call.1} parent=21 // pred_fallthru
      _
    // Predicated region
    $region29: #{tpu_custom_call.1} parent=21 // pred_check
      %p41 = pneg %p37
    $region30: #{tpu_custom_call.1} parent=21 // pred_check_branch
      %43 = sbr.rel (%p41) target = $region32
    $region31: #{tpu_custom_call.1} parent=21 // pred_region
      %s44 = sshllo.u32 0, 1
      loop: start=0, step=1, limit=1
      $region33: #{tpu_custom_call.1} parent=31 // loop_pre_header
        _
      $region34: #{tpu_custom_call.1} parent=31 // loop_header
        %s46 = sphi 0, %s50
        %p47 = scmp.ge.s32.totalorder %s46, 1
        %s51 = sphi %s34, %s34
        %s52 = sphi %s35, %s35
      $region35: #{tpu_custom_call.1} parent=31 // loop_header_branch
        %49 = sbr.rel (%p47) target = $region39
      $region36: #{tpu_custom_call.1} parent=31 // loop_body
        %v53 = vld [vmem:[%s51] sm:%s44]
        %54 = vst [vmem:[%s52] sm:%s44] %v53
      $region37: #{tpu_custom_call.1} parent=31 // loop_footer
        %s50 = sadd.s32 1, %s46
      $region38: #{tpu_custom_call.1} parent=31 // loop_footer_branch
        %45 = sbr.rel target = $region34
      $region39: #{tpu_custom_call.1} parent=31 // loop_exit
        _
    $region32: #{tpu_custom_call.1} parent=21 // pred_fallthru
      _
    // Predicated region
    $region51: #{tpu_custom_call.1} parent=21 // pred_check
      _
    $region52: #{tpu_custom_call.1} parent=21 // pred_check_branch
      %78 = sbr.rel (0) target = $region54
    $region53: #{tpu_custom_call.1} parent=21 // pred_region
      %79 = vsyncadd [#allocation3], 16
    $region54: #{tpu_custom_call.1} parent=21 // pred_fallthru
      _
  $region22: #{tpu_custom_call.1} parent=0 // loop_footer
    %s31 = sadd.s32 1, %s27
  $region23: #{tpu_custom_call.1} parent=0 // loop_footer_branch
    %26 = sbr.rel target = $region19
  $region24: #{tpu_custom_call.1} parent=0 // loop_exit
    _
  loop: start=0, step=1, limit=96
  $region55: #{tpu_custom_call.1} parent=0 // loop_pre_header
    _
  $region56: #{tpu_custom_call.1} parent=0 // loop_header
    %s81 = sphi 0, %s85
    %p82 = scmp.ge.s32.totalorder %s81, 96
  $region57: #{tpu_custom_call.1} parent=0 // loop_header_branch
    %84 = sbr.rel (%p82) target = $region61
  $region58: #{tpu_custom_call.1} parent=0 // loop_body
    %s86 = sadd.s32 %s25, %s81
    %s87 = sld [smem:[#allocation5 + %s86]]
    %89 = dma.done [#allocation3], 16
  $region59: #{tpu_custom_call.1} parent=0 // loop_footer
    %s85 = sadd.s32 1, %s81
  $region60: #{tpu_custom_call.1} parent=0 // loop_footer_branch
    %80 = sbr.rel target = $region56
  $region61: #{tpu_custom_call.1} parent=0 // loop_exit
    _
  %p90 = scmp.eq.s32.totalorder 0, 0
  // Predicated region
  $region62: #{tpu_custom_call.1} parent=0 // pred_check
    %p91 = pneg %p90
  $region63: #{tpu_custom_call.1} parent=0 // pred_check_branch
    %93 = sbr.rel (%p91) target = $region65
  $region64: #{tpu_custom_call.1} parent=0 // pred_region
    %vm94 = vcmask 261120
    %95 = vst.msk [vmem:[#allocation2] sm:$0xff] %vm94, 0.0
    %96 = vst.msk [vmem:[#allocation2 + $0x8] sm:$0xff] %vm94, 0.0
    %97 = vst.msk [vmem:[#allocation2 + $0x50] sm:$0xff] %vm94, 0.0
    %98 = vst.msk [vmem:[#allocation2 + $0x58] sm:$0xff] %vm94, 0.0
  $region65: #{tpu_custom_call.1} parent=0 // pred_fallthru
    _
  %v99 = vld [vmem:[#allocation2] sm:$0xff]
  %v100 = vld [vmem:[#allocation2 + $0x8] sm:$0xff]
  %v101 = vld [vmem:[#allocation2 + $0x10] sm:$0xff]
  %v102 = vld [vmem:[#allocation2 + $0x18] sm:$0xff]
  %v103 = vld [vmem:[#allocation2 + $0x20] sm:$0xff]
  %v104 = vld [vmem:[#allocation2 + $0x28] sm:$0xff]
  %v105 = vld [vmem:[#allocation2 + $0x30] sm:$0xff]
  %v106 = vld [vmem:[#allocation2 + $0x38] sm:$0xff]
  %v107 = vld [vmem:[#allocation2 + $0x40] sm:$0xff]
  %v108 = vld [vmem:[#allocation2 + $0x48] sm:$0xff]
  %v109 = vld [vmem:[#allocation2 + $0x50] sm:$0xff]
  %v110 = vld [vmem:[#allocation2 + $0x58] sm:$0xff]
  %121 = vrot.lane.b32.xlu0 %v100, 32
  %v122 = vpop.permute.xlu0 %121
  %123 = vrot.lane.b32.xlu0 %v101, 32
  %v124 = vpop.permute.xlu0 %123
  %125 = vrot.lane.b32.xlu0 %v102, 32
  %v126 = vpop.permute.xlu0 %125
  %127 = vrot.lane.b32.xlu0 %v103, 32
  %v128 = vpop.permute.xlu0 %127
  %129 = vrot.lane.b32.xlu0 %v104, 32
  %v130 = vpop.permute.xlu0 %129
  %131 = vrot.lane.b32.xlu0 %v105, 32
  %v132 = vpop.permute.xlu0 %131
  %133 = vrot.lane.b32.xlu0 %v106, 32
  %v134 = vpop.permute.xlu0 %133
  %135 = vrot.lane.b32.xlu0 %v107, 32
  %v136 = vpop.permute.xlu0 %135
  %137 = vrot.lane.b32.xlu0 %v108, 32
  %v138 = vpop.permute.xlu0 %137
  %139 = vrot.lane.b32.xlu0 %v109, 32
  %v140 = vpop.permute.xlu0 %139
  %152 = vrot.lane.b32.xlu0 %v101, 64
  %v153 = vpop.permute.xlu0 %152
  %154 = vrot.lane.b32.xlu0 %v102, 64
  %v155 = vpop.permute.xlu0 %154
  %156 = vrot.lane.b32.xlu0 %v103, 64
  %v157 = vpop.permute.xlu0 %156
  %158 = vrot.lane.b32.xlu0 %v104, 64
  %v159 = vpop.permute.xlu0 %158
  %160 = vrot.lane.b32.xlu0 %v105, 64
  %v161 = vpop.permute.xlu0 %160
  %162 = vrot.lane.b32.xlu0 %v106, 64
  %v163 = vpop.permute.xlu0 %162
  %164 = vrot.lane.b32.xlu0 %v107, 64
  %v165 = vpop.permute.xlu0 %164
  %166 = vrot.lane.b32.xlu0 %v108, 64
  %v167 = vpop.permute.xlu0 %166
  %168 = vrot.lane.b32.xlu0 %v109, 64
  %v169 = vpop.permute.xlu0 %168
  %170 = vrot.lane.b32.xlu0 %v110, 64
  %v171 = vpop.permute.xlu0 %170
  %vm182 = vcmask 261120
  %v183 = vsel %vm182, %v99, %v122
  %v184 = vsel %vm182, %v100, %v124
  %v185 = vsel %vm182, %v101, %v126
  %v186 = vsel %vm182, %v102, %v128
  %v187 = vsel %vm182, %v103, %v130
  %v188 = vsel %vm182, %v104, %v132
  %v189 = vsel %vm182, %v105, %v134
  %v190 = vsel %vm182, %v106, %v136
  %v191 = vsel %vm182, %v107, %v138
  %v192 = vsel %vm182, %v108, %v140
  %vm193 = vcmask 523264
  %v194 = vsel %vm193, %v183, %v153
  %v195 = vsel %vm193, %v184, %v155
  %v196 = vsel %vm193, %v185, %v157
  %v197 = vsel %vm193, %v186, %v159
  %v198 = vsel %vm193, %v187, %v161
  %v199 = vsel %vm193, %v188, %v163
  %v200 = vsel %vm193, %v189, %v165
  %v201 = vsel %vm193, %v190, %v167
  %v202 = vsel %vm193, %v191, %v169
  %v203 = vsel %vm193, %v192, %v171
  %v204 = vld [vmem:[%s2] sm:$0xff]
  %v205 = vld [vmem:[%s2 + $0x8] sm:$0xff]
  %v206 = vld [vmem:[%s2 + $0x10] sm:$0xff]
  %v207 = vld [vmem:[%s2 + $0x18] sm:$0xff]
  %v208 = vld [vmem:[%s2 + $0x20] sm:$0xff]
  %v209 = vld [vmem:[%s2 + $0x28] sm:$0xff]
  %v210 = vld [vmem:[%s2 + $0x30] sm:$0xff]
  %v211 = vld [vmem:[%s2 + $0x38] sm:$0xff]
  %v212 = vld [vmem:[%s2 + $0x40] sm:$0xff]
  %v213 = vld [vmem:[%s2 + $0x48] sm:$0xff]
  %v214 = vld [vmem:[%s2 + $0x50] sm:$0xff]
  %v215 = vld [vmem:[%s2 + $0x58] sm:$0xff]
  %v216 = vld [vmem:[%s3] sm:$0x1]
  %v218 = vlaneseq
  %v219 = vshrl.u32 %v218, 7
  %v220 = vsub.s32 0, %v219
  %v221 = vrot.slane %v216, %v220
  %vm223 = vcmask 785408
  %v225 = vsel %vm223, %v194, 0
  %v228 = vsel %vm223, %v195, 0
  %v231 = vsel %vm223, %v196, 0
  %v234 = vsel %vm223, %v197, 0
  %v237 = vsel %vm223, %v198, 0
  %v240 = vsel %vm223, %v199, 0
  %v243 = vsel %vm223, %v200, 0
  %v246 = vsel %vm223, %v201, 0
  %v249 = vsel %vm223, %v202, 0
  %v252 = vsel %vm223, %v203, 0
  %254 = vmatprep.subr.mxu0 0.0
  %255 = vmatpush1.msra.mxu0 %v204
  %256 = vmatprep.subr.mxu0 0.0
  %257 = vmatpush1.msra.mxu0 %v205
  %258 = vmatprep.subr.mxu0 0.0
  %259 = vmatpush1.msra.mxu0 %v206
  %260 = vmatprep.subr.mxu0 0.0
  %261 = vmatpush1.msra.mxu0 %v207
  %262 = vmatprep.subr.mxu0 0.0
  %263 = vmatpush1.msra.mxu0 %v208
  %264 = vmatprep.subr.mxu0 0.0
  %265 = vmatpush1.msra.mxu0 %v209
  %266 = vmatprep.subr.mxu0 0.0
  %267 = vmatpush1.msra.mxu0 %v210
  %268 = vmatprep.subr.mxu0 0.0
  %269 = vmatpush1.msra.mxu0 %v211
  %270 = vmatprep.subr.mxu0 0.0
  %271 = vmatpush1.msra.mxu0 %v212
  %272 = vmatprep.subr.mxu0 0.0
  %273 = vmatpush1.msra.mxu0 %v213
  %274 = vmatprep.subr.mxu0 0.0
  %275 = vmatpush1.msra.mxu0 %v214
  %276 = vmatprep.subr.mxu0 0.0
  %277 = vmatpush1.msra.mxu0 %v215
  %278 = vmatprep.subr.mxu0 0.0
  %279 = vmatpush1.msra.mxu0 0.0
  %280 = vmatprep.subr.mxu0 0.0
  %281 = vmatpush1.msra.mxu0 0.0
  %282 = vmatprep.subr.mxu0 0.0
  %283 = vmatpush1.msra.mxu0 0.0
  %284 = vmatprep.subr.mxu0 0.0
  %285 = vmatpush1.msra.mxu0 0.0
  %286 = vmatprep.subr.mxu0 0.0
  %287 = vmatpush1.msra.mxu0 0.0
  %288 = vmatprep.subr.mxu0 0.0
  %289 = vmatpush1.msra.mxu0 0.0
  %290 = vmatprep.subr.mxu0 0.0
  %291 = vmatpush1.msra.mxu0 0.0
  %292 = vmatprep.subr.mxu0 0.0
  %293 = vmatpush1.msra.mxu0 0.0
  %294 = vmatprep.subr.mxu0 0.0
  %295 = vmatpush1.msra.mxu0 0.0
  %296 = vmatprep.subr.mxu0 0.0
  %297 = vmatpush1.msra.mxu0 0.0
  %298 = vmatprep.subr.mxu0 0.0
  %299 = vmatpush1.msra.mxu0 0.0
  %300 = vmatprep.subr.mxu0 0.0
  %301 = vmatpush1.msra.mxu0 0.0
  %302 = vmatprep.subr.mxu0 0.0
  %303 = vmatpush1.msra.mxu0 0.0
  %304 = vmatprep.subr.mxu0 0.0
  %305 = vmatpush1.msra.mxu0 0.0
  %306 = vmatprep.subr.mxu0 0.0
  %307 = vmatpush1.msra.mxu0 0.0
  %308 = vmatprep.subr.mxu0 0.0
  %309 = vmatpush1.msra.mxu0 0.0
  %310 = vmatprep.subr.mxu0 0.0
  %311 = vmatpush1.msra.mxu0 0.0
  %312 = vmatprep.subr.mxu0 0.0
  %313 = vmatpush1.msra.mxu0 0.0
  %314 = vmatprep.subr.mxu0 0.0
  %315 = vmatpush1.msra.mxu0 0.0
  %316 = vmatprep.subr.mxu0 0.0
  %317 = vmatpush1.msra.mxu0 0.0
  %318 = vmatprep.mubr.f32.mxu0 0.0
  %319 = vmatmul.mubr.f32.gmra.mrb[0].mxu0 %v225
  %v320 = vpop.f32.mrb[0].mxu0
  %v321 = vadd.f32 %v221, %v320
  %v322 = vpop.f32.mrb[0].mxu0
  %323 = vmatprep.mubr.f32.mxu0 0.0
  %324 = vmatmul.mubr.f32.gmra.mrb[0].mxu0 %v228
  %v325 = vpop.f32.mrb[0].mxu0
  %v326 = vadd.f32 %v221, %v325
  %v327 = vpop.f32.mrb[0].mxu0
  %328 = vmatprep.mubr.f32.mxu0 0.0
  %329 = vmatmul.mubr.f32.gmra.mrb[0].mxu0 %v231
  %v330 = vpop.f32.mrb[0].mxu0
  %v331 = vadd.f32 %v221, %v330
  %v332 = vpop.f32.mrb[0].mxu0
  %333 = vmatprep.mubr.f32.mxu0 0.0
  %334 = vmatmul.mubr.f32.gmra.mrb[0].mxu0 %v234
  %v335 = vpop.f32.mrb[0].mxu0
  %v336 = vadd.f32 %v221, %v335
  %v337 = vpop.f32.mrb[0].mxu0
  %338 = vmatprep.mubr.f32.mxu0 0.0
  %339 = vmatmul.mubr.f32.gmra.mrb[0].mxu0 %v237
  %v340 = vpop.f32.mrb[0].mxu0
  %v341 = vadd.f32 %v221, %v340
  %v342 = vpop.f32.mrb[0].mxu0
  %343 = vmatprep.mubr.f32.mxu0 0.0
  %344 = vmatmul.mubr.f32.gmra.mrb[0].mxu0 %v240
  %v345 = vpop.f32.mrb[0].mxu0
  %v346 = vadd.f32 %v221, %v345
  %v347 = vpop.f32.mrb[0].mxu0
  %348 = vmatprep.mubr.f32.mxu0 0.0
  %349 = vmatmul.mubr.f32.gmra.mrb[0].mxu0 %v243
  %v350 = vpop.f32.mrb[0].mxu0
  %v351 = vadd.f32 %v221, %v350
  %v352 = vpop.f32.mrb[0].mxu0
  %353 = vmatprep.mubr.f32.mxu0 0.0
  %354 = vmatmul.mubr.f32.gmra.mrb[0].mxu0 %v246
  %v355 = vpop.f32.mrb[0].mxu0
  %v356 = vadd.f32 %v221, %v355
  %v357 = vpop.f32.mrb[0].mxu0
  %358 = vmatprep.mubr.f32.mxu0 0.0
  %359 = vmatmul.mubr.f32.gmra.mrb[0].mxu0 %v249
  %v360 = vpop.f32.mrb[0].mxu0
  %v361 = vadd.f32 %v221, %v360
  %v362 = vpop.f32.mrb[0].mxu0
  %363 = vmatprep.mubr.f32.mxu0 0.0
  %364 = vmatmul.mubr.f32.gmra.mrb[0].mxu0 %v252
  %v365 = vpop.f32.mrb[0].mxu0
  %v366 = vadd.f32 %v221, %v365
  %v367 = vpop.f32.mrb[0].mxu0
  %368 = vdwg.mxu0
  %v369 = vmax.f32 %v321, 0.0
  %v370 = vmax.f32 %v326, 0.0
  %v371 = vmax.f32 %v331, 0.0
  %v372 = vmax.f32 %v336, 0.0
  %v373 = vmax.f32 %v341, 0.0
  %v374 = vmax.f32 %v346, 0.0
  %v375 = vmax.f32 %v351, 0.0
  %v376 = vmax.f32 %v356, 0.0
  %v377 = vmax.f32 %v361, 0.0
  %v378 = vmax.f32 %v366, 0.0
  %v379 = vlaneseq
  %v380 = vshrl.u32 %v379, 7
  %v381 = vadd.s32 %v380, 8
  %v382 = vadd.s32 %v380, 16
  %v383 = vadd.s32 %v380, 24
  %v384 = vadd.s32 %v380, 32
  %v385 = vadd.s32 %v380, 40
  %v386 = vadd.s32 %v380, 48
  %v387 = vadd.s32 %v380, 56
  %v388 = vadd.s32 %v380, 64
  %v389 = vadd.s32 %v380, 72
  %s390 = scalar_select %p90, 8, 0
  %v391 = vstv %s390
  %vm392 = vcmp.ge.s32.totalorder %v380, %v391
  %vm393 = vcmp.ge.s32.totalorder %v381, %v391
  %vm394 = vcmp.ge.s32.totalorder %v382, %v391
  %vm395 = vcmp.ge.s32.totalorder %v383, %v391
  %vm396 = vcmp.ge.s32.totalorder %v384, %v391
  %vm397 = vcmp.ge.s32.totalorder %v385, %v391
  %vm398 = vcmp.ge.s32.totalorder %v386, %v391
  %vm399 = vcmp.ge.s32.totalorder %v387, %v391
  %vm400 = vcmp.ge.s32.totalorder %v388, %v391
  %vm401 = vcmp.ge.s32.totalorder %v389, %v391
  %s402 = ssub.s32 80, %s390
  %v403 = vstv %s402
  %vm404 = vcmp.lt.s32.totalorder %v380, %v403
  %vm405 = vcmp.lt.s32.totalorder %v381, %v403
  %vm406 = vcmp.lt.s32.totalorder %v382, %v403
  %vm407 = vcmp.lt.s32.totalorder %v383, %v403
  %vm408 = vcmp.lt.s32.totalorder %v384, %v403
  %vm409 = vcmp.lt.s32.totalorder %v385, %v403
  %vm410 = vcmp.lt.s32.totalorder %v386, %v403
  %vm411 = vcmp.lt.s32.totalorder %v387, %v403
  %vm412 = vcmp.lt.s32.totalorder %v388, %v403
  %vm413 = vcmp.lt.s32.totalorder %v389, %v403
  %vm414 = vmand %vm392, %vm404
  %vm415 = vmand %vm393, %vm405
  %vm416 = vmand %vm394, %vm406
  %vm417 = vmand %vm395, %vm407
  %vm418 = vmand %vm396, %vm408
  %vm419 = vmand %vm397, %vm409
  %vm420 = vmand %vm398, %vm410
  %vm421 = vmand %vm399, %vm411
  %vm422 = vmand %vm400, %vm412
  %vm423 = vmand %vm401, %vm413
  %v424 = vsel %vm414, 1, 0
  %v425 = vsel %vm415, 1, 0
  %v426 = vsel %vm416, 1, 0
  %v427 = vsel %vm417, 1, 0
  %v428 = vsel %vm418, 1, 0
  %v429 = vsel %vm419, 1, 0
  %v430 = vsel %vm420, 1, 0
  %v431 = vsel %vm421, 1, 0
  %v432 = vsel %vm422, 1, 0
  %v433 = vsel %vm423, 1, 0
  %vm434 = vcmp.eq.s32.totalorder %v424, 1
  %vm435 = vcmp.eq.s32.totalorder %v425, 1
  %vm436 = vcmp.eq.s32.totalorder %v426, 1
  %vm437 = vcmp.eq.s32.totalorder %v427, 1
  %vm438 = vcmp.eq.s32.totalorder %v428, 1
  %vm439 = vcmp.eq.s32.totalorder %v429, 1
  %vm440 = vcmp.eq.s32.totalorder %v430, 1
  %vm441 = vcmp.eq.s32.totalorder %v431, 1
  %vm442 = vcmp.eq.s32.totalorder %v432, 1
  %vm443 = vcmp.eq.s32.totalorder %v433, 1
  %v444 = vsel %vm434, %v369, 0.0
  %v445 = vsel %vm435, %v370, 0.0
  %v446 = vsel %vm436, %v371, 0.0
  %v447 = vsel %vm437, %v372, 0.0
  %v448 = vsel %vm438, %v373, 0.0
  %v449 = vsel %vm439, %v374, 0.0
  %v450 = vsel %vm440, %v375, 0.0
  %v451 = vsel %vm441, %v376, 0.0
  %v452 = vsel %vm442, %v377, 0.0
  %v453 = vsel %vm443, %v378, 0.0
  %462 = vrot.lane.b32.xlu0 %v445, 32
  %v463 = vpop.permute.xlu0 %462
  %464 = vrot.lane.b32.xlu0 %v446, 32
  %v465 = vpop.permute.xlu0 %464
  %466 = vrot.lane.b32.xlu0 %v447, 32
  %v467 = vpop.permute.xlu0 %466
  %468 = vrot.lane.b32.xlu0 %v448, 32
  %v469 = vpop.permute.xlu0 %468
  %470 = vrot.lane.b32.xlu0 %v449, 32
  %v471 = vpop.permute.xlu0 %470
  %472 = vrot.lane.b32.xlu0 %v450, 32
  %v473 = vpop.permute.xlu0 %472
  %474 = vrot.lane.b32.xlu0 %v451, 32
  %v475 = vpop.permute.xlu0 %474
  %476 = vrot.lane.b32.xlu0 %v452, 32
  %v477 = vpop.permute.xlu0 %476
  %487 = vrot.lane.b32.xlu0 %v446, 64
  %v488 = vpop.permute.xlu0 %487
  %489 = vrot.lane.b32.xlu0 %v447, 64
  %v490 = vpop.permute.xlu0 %489
  %491 = vrot.lane.b32.xlu0 %v448, 64
  %v492 = vpop.permute.xlu0 %491
  %493 = vrot.lane.b32.xlu0 %v449, 64
  %v494 = vpop.permute.xlu0 %493
  %495 = vrot.lane.b32.xlu0 %v450, 64
  %v496 = vpop.permute.xlu0 %495
  %497 = vrot.lane.b32.xlu0 %v451, 64
  %v498 = vpop.permute.xlu0 %497
  %499 = vrot.lane.b32.xlu0 %v452, 64
  %v500 = vpop.permute.xlu0 %499
  %501 = vrot.lane.b32.xlu0 %v453, 64
  %v502 = vpop.permute.xlu0 %501
  %v511 = vsel %vm182, %v444, %v463
  %v512 = vsel %vm182, %v445, %v465
  %v513 = vsel %vm182, %v446, %v467
  %v514 = vsel %vm182, %v447, %v469
  %v515 = vsel %vm182, %v448, %v471
  %v516 = vsel %vm182, %v449, %v473
  %v517 = vsel %vm182, %v450, %v475
  %v518 = vsel %vm182, %v451, %v477
  %v519 = vsel %vm193, %v511, %v488
  %v520 = vsel %vm193, %v512, %v490
  %v521 = vsel %vm193, %v513, %v492
  %v522 = vsel %vm193, %v514, %v494
  %v523 = vsel %vm193, %v515, %v496
  %v524 = vsel %vm193, %v516, %v498
  %v525 = vsel %vm193, %v517, %v500
  %v526 = vsel %vm193, %v518, %v502
  %v527 = vld [vmem:[%s4] sm:$0xff]
  %v528 = vld [vmem:[%s4 + $0x8] sm:$0xff]
  %v529 = vld [vmem:[%s4 + $0x10] sm:$0xff]
  %v530 = vld [vmem:[%s4 + $0x18] sm:$0xff]
  %v531 = vld [vmem:[%s4 + $0x20] sm:$0xff]
  %v532 = vld [vmem:[%s4 + $0x28] sm:$0xff]
  %v533 = vld [vmem:[%s4 + $0x30] sm:$0xff]
  %v534 = vld [vmem:[%s4 + $0x38] sm:$0xff]
  %v535 = vld [vmem:[%s4 + $0x40] sm:$0xff]
  %v536 = vld [vmem:[%s4 + $0x48] sm:$0xff]
  %v537 = vld [vmem:[%s4 + $0x50] sm:$0xff]
  %v538 = vld [vmem:[%s4 + $0x58] sm:$0xff]
  %v539 = vld [vmem:[%s5] sm:$0x1]
  %v541 = vlaneseq
  %v542 = vshrl.u32 %v541, 7
  %v543 = vsub.s32 0, %v542
  %v544 = vrot.slane %v539, %v543
  %v547 = vsel %vm223, %v519, 0
  %v550 = vsel %vm223, %v520, 0
  %v553 = vsel %vm223, %v521, 0
  %v556 = vsel %vm223, %v522, 0
  %v559 = vsel %vm223, %v523, 0
  %v562 = vsel %vm223, %v524, 0
  %v565 = vsel %vm223, %v525, 0
  %v568 = vsel %vm223, %v526, 0
  %570 = vmatprep.subr.mxu0 0.0
  %571 = vmatpush1.msra.mxu0 %v527
  %572 = vmatprep.subr.mxu0 0.0
  %573 = vmatpush1.msra.mxu0 %v528
  %574 = vmatprep.subr.mxu0 0.0
  %575 = vmatpush1.msra.mxu0 %v529
  %576 = vmatprep.subr.mxu0 0.0
  %577 = vmatpush1.msra.mxu0 %v530
  %578 = vmatprep.subr.mxu0 0.0
  %579 = vmatpush1.msra.mxu0 %v531
  %580 = vmatprep.subr.mxu0 0.0
  %581 = vmatpush1.msra.mxu0 %v532
  %582 = vmatprep.subr.mxu0 0.0
  %583 = vmatpush1.msra.mxu0 %v533
  %584 = vmatprep.subr.mxu0 0.0
  %585 = vmatpush1.msra.mxu0 %v534
  %586 = vmatprep.subr.mxu0 0.0
  %587 = vmatpush1.msra.mxu0 %v535
  %588 = vmatprep.subr.mxu0 0.0
  %589 = vmatpush1.msra.mxu0 %v536
  %590 = vmatprep.subr.mxu0 0.0
  %591 = vmatpush1.msra.mxu0 %v537
  %592 = vmatprep.subr.mxu0 0.0
  %593 = vmatpush1.msra.mxu0 %v538
  %594 = vmatprep.subr.mxu0 0.0
  %595 = vmatpush1.msra.mxu0 0.0
  %596 = vmatprep.subr.mxu0 0.0
  %597 = vmatpush1.msra.mxu0 0.0
  %598 = vmatprep.subr.mxu0 0.0
  %599 = vmatpush1.msra.mxu0 0.0
  %600 = vmatprep.subr.mxu0 0.0
  %601 = vmatpush1.msra.mxu0 0.0
  %602 = vmatprep.subr.mxu0 0.0
  %603 = vmatpush1.msra.mxu0 0.0
  %604 = vmatprep.subr.mxu0 0.0
  %605 = vmatpush1.msra.mxu0 0.0
  %606 = vmatprep.subr.mxu0 0.0
  %607 = vmatpush1.msra.mxu0 0.0
  %608 = vmatprep.subr.mxu0 0.0
  %609 = vmatpush1.msra.mxu0 0.0
  %610 = vmatprep.subr.mxu0 0.0
  %611 = vmatpush1.msra.mxu0 0.0
  %612 = vmatprep.subr.mxu0 0.0
  %613 = vmatpush1.msra.mxu0 0.0
  %614 = vmatprep.subr.mxu0 0.0
  %615 = vmatpush1.msra.mxu0 0.0
  %616 = vmatprep.subr.mxu0 0.0
  %617 = vmatpush1.msra.mxu0 0.0
  %618 = vmatprep.subr.mxu0 0.0
  %619 = vmatpush1.msra.mxu0 0.0
  %620 = vmatprep.subr.mxu0 0.0
  %621 = vmatpush1.msra.mxu0 0.0
  %622 = vmatprep.subr.mxu0 0.0
  %623 = vmatpush1.msra.mxu0 0.0
  %624 = vmatprep.subr.mxu0 0.0
  %625 = vmatpush1.msra.mxu0 0.0
  %626 = vmatprep.subr.mxu0 0.0
  %627 = vmatpush1.msra.mxu0 0.0
  %628 = vmatprep.subr.mxu0 0.0
  %629 = vmatpush1.msra.mxu0 0.0
  %630 = vmatprep.subr.mxu0 0.0
  %631 = vmatpush1.msra.mxu0 0.0
  %632 = vmatprep.subr.mxu0 0.0
  %633 = vmatpush1.msra.mxu0 0.0
  %634 = vmatprep.mubr.f32.mxu0 0.0
  %635 = vmatmul.mubr.f32.gmra.mrb[0].mxu0 %v547
  %v636 = vpop.f32.mrb[0].mxu0
  %v637 = vadd.f32 %v544, %v636
  %v638 = vpop.f32.mrb[0].mxu0
  %639 = vmatprep.mubr.f32.mxu0 0.0
  %640 = vmatmul.mubr.f32.gmra.mrb[0].mxu0 %v550
  %v641 = vpop.f32.mrb[0].mxu0
  %v642 = vadd.f32 %v544, %v641
  %v643 = vpop.f32.mrb[0].mxu0
  %644 = vmatprep.mubr.f32.mxu0 0.0
  %645 = vmatmul.mubr.f32.gmra.mrb[0].mxu0 %v553
  %v646 = vpop.f32.mrb[0].mxu0
  %v647 = vadd.f32 %v544, %v646
  %v648 = vpop.f32.mrb[0].mxu0
  %649 = vmatprep.mubr.f32.mxu0 0.0
  %650 = vmatmul.mubr.f32.gmra.mrb[0].mxu0 %v556
  %v651 = vpop.f32.mrb[0].mxu0
  %v652 = vadd.f32 %v544, %v651
  %v653 = vpop.f32.mrb[0].mxu0
  %654 = vmatprep.mubr.f32.mxu0 0.0
  %655 = vmatmul.mubr.f32.gmra.mrb[0].mxu0 %v559
  %v656 = vpop.f32.mrb[0].mxu0
  %v657 = vadd.f32 %v544, %v656
  %v658 = vpop.f32.mrb[0].mxu0
  %659 = vmatprep.mubr.f32.mxu0 0.0
  %660 = vmatmul.mubr.f32.gmra.mrb[0].mxu0 %v562
  %v661 = vpop.f32.mrb[0].mxu0
  %v662 = vadd.f32 %v544, %v661
  %v663 = vpop.f32.mrb[0].mxu0
  %664 = vmatprep.mubr.f32.mxu0 0.0
  %665 = vmatmul.mubr.f32.gmra.mrb[0].mxu0 %v565
  %v666 = vpop.f32.mrb[0].mxu0
  %v667 = vadd.f32 %v544, %v666
  %v668 = vpop.f32.mrb[0].mxu0
  %669 = vmatprep.mubr.f32.mxu0 0.0
  %670 = vmatmul.mubr.f32.gmra.mrb[0].mxu0 %v568
  %v671 = vpop.f32.mrb[0].mxu0
  %v672 = vadd.f32 %v544, %v671
  %v673 = vpop.f32.mrb[0].mxu0
  %674 = vdwg.mxu0
  %v675 = vmax.f32 %v637, 0.0
  %v676 = vmax.f32 %v642, 0.0
  %v677 = vmax.f32 %v647, 0.0
  %v678 = vmax.f32 %v652, 0.0
  %v679 = vmax.f32 %v657, 0.0
  %v680 = vmax.f32 %v662, 0.0
  %v681 = vmax.f32 %v667, 0.0
  %v682 = vmax.f32 %v672, 0.0
  %v683 = vadd.f32 %v675, %v101
  %v684 = vadd.f32 %v676, %v102
  %v685 = vadd.f32 %v677, %v103
  %v686 = vadd.f32 %v678, %v104
  %v687 = vadd.f32 %v679, %v105
  %v688 = vadd.f32 %v680, %v106
  %v689 = vadd.f32 %v681, %v107
  %v690 = vadd.f32 %v682, %v108
  %v691 = vmax.f32 %v683, 0.0
  %v692 = vmax.f32 %v684, 0.0
  %v693 = vmax.f32 %v685, 0.0
  %v694 = vmax.f32 %v686, 0.0
  %v695 = vmax.f32 %v687, 0.0
  %v696 = vmax.f32 %v688, 0.0
  %v697 = vmax.f32 %v689, 0.0
  %v698 = vmax.f32 %v690, 0.0
  %699 = vst.msk [vmem:[%s6] sm:$0xff] %vm182, %v691
  %700 = vst.msk [vmem:[%s6 + $0x8] sm:$0xff] %vm182, %v692
  %701 = vst.msk [vmem:[%s6 + $0x10] sm:$0xff] %vm182, %v693
  %702 = vst.msk [vmem:[%s6 + $0x18] sm:$0xff] %vm182, %v694
  %703 = vst.msk [vmem:[%s6 + $0x20] sm:$0xff] %vm182, %v695
  %704 = vst.msk [vmem:[%s6 + $0x28] sm:$0xff] %vm182, %v696
  %705 = vst.msk [vmem:[%s6 + $0x30] sm:$0xff] %vm182, %v697
  %706 = vst.msk [vmem:[%s6 + $0x38] sm:$0xff] %vm182, %v698
  // Predicated region
  $region66: #{tpu_custom_call.1} parent=0 // pred_check
    _
  $region67: #{tpu_custom_call.1} parent=0 // pred_check_branch
    %708 = sbr.rel (0) target = $region69
  $region68: #{tpu_custom_call.1} parent=0 // pred_region
    _
  $region69: #{tpu_custom_call.1} parent=0 // pred_fallthru
    _
  // Predicated region
  $region70: #{tpu_custom_call.1} parent=0 // pred_check
    _
  $region71: #{tpu_custom_call.1} parent=0 // pred_check_branch
    %710 = sbr.rel (0) target = $region73
  $region72: #{tpu_custom_call.1} parent=0 // pred_region
    _
  $region73: #{tpu_custom_call.1} parent=0 // pred_fallthru
    _
  %711 = vsyncmov [#allocation3]
  %s712 = vpop.sfrf %711
  %p713 = scmp.eq.s32.totalorder %s712, 0
  %p714 = pneg %p713
  %716 = shalt.err (%p714)

</llo_original>
